<compile_context>
chip_gen: v7x
topology: tpu7x:2x2x1
jax: 0.10.0
libtpu: 0.0.40
codegen_flags: <defaults>
</compile_context>

<pallas_src>
import functools

import jax
import jax.numpy as jnp
from jax.experimental import pallas as pl
from jax.experimental.pallas import tpu as pltpu


def _pad_dhw_kernel(x_ref, o_ref, *, d, h, w):
    """General case (W padded).  Blocks: x (TB,d,h,w) -> o (TB,dp,hp,wp)."""
    tb, dp, hp, wp = o_ref.shape
    # Interior copy first; then zero only the three disjoint pad slabs.
    o_ref[:, 0:d, 0:h, 0:w] = x_ref[...]
    if dp > d:
        o_ref[:, d:dp, :, :] = jnp.zeros((tb, dp - d, hp, wp), o_ref.dtype)
    if hp > h:
        o_ref[:, 0:d, h:hp, :] = jnp.zeros((tb, d, hp - h, wp), o_ref.dtype)
    if wp > w:
        o_ref[:, 0:d, 0:h, w:wp] = jnp.zeros((tb, d, h, wp - w), o_ref.dtype)


def _pad_d_hw_kernel(x_ref, o_ref, *, d, hw):
    """W not padded: (H, W) folded into a lane-dense last dim.
    Blocks: x (TB, d, h*w) -> o (TB, dp, hp*w)."""
    tb, dp, hwp = o_ref.shape
    o_ref[:, 0:d, 0:hw] = x_ref[...]
    if dp > d:                      # D pad slab
        o_ref[:, d:dp, :] = jnp.zeros((tb, dp - d, hwp), o_ref.dtype)
    if hwp > hw:                    # H pad slab (flattened tail of each d-row)
        o_ref[:, 0:d, hw:hwp] = jnp.zeros((tb, d, hwp - hw), o_ref.dtype)


def _choose_batch_tile(b, bytes_per_unit, target_bytes=4 << 20):
    """Largest divisor of b with one (input+output) block <= ~target_bytes,
    keeping >= 2 grid steps when possible so both TensorCores get work."""
    max_tb = max(1, min(b, target_bytes // max(1, bytes_per_unit)))
    if b >= 2:
        max_tb = min(max_tb, max(1, b // 2))
    for tb in range(max_tb, 0, -1):
        if b % tb == 0:
            return tb
    return 1


def pad_layer(x, pad_dims):
    """Pallas implementation of PadLayer.forward.

    Args:
      x: array of shape (N, C, D, H, W)  (NCDHW layout).
      pad_dims: tuple/list of 3 non-negative ints (pd_D, pd_H, pd_W).
    Returns:
      array of shape (N, C, D + pd_D, H + pd_H, W + pd_W), same dtype.
    """
    pd, ph, pw = int(pad_dims[0]), int(pad_dims[1]), int(pad_dims[2])
    assert pd >= 0 and ph >= 0 and pw >= 0, "PadLayer only supports high-side zero padding"
    if pd + ph + pw == 0:
        return x

    n, c, d, h, w = x.shape
    dp, hp, wp = d + pd, h + ph, w + pw
    b = n * c
    itemsize = jnp.dtype(x.dtype).itemsize

    in_unit = d * h * w * itemsize        # bytes per (n,c) input volume
    out_unit = dp * hp * wp * itemsize    # bytes per (n,c) output volume

    tb = _choose_batch_tile(b, in_unit + out_unit)
    grid = (b // tb,)

    # VMEM: double-buffered input block + double-buffered output block + slack.
    block_bytes = tb * (in_unit + out_unit)
    vmem_limit = int(min(64 * 1024 * 1024,
                         max(32 * 1024 * 1024, 2 * block_bytes + (2 << 20))))

    cost = pl.CostEstimate(
        flops=0,
        transcendentals=0,
        bytes_accessed=b * (in_unit + out_unit),
    )
    cparams = pltpu.CompilerParams(
        dimension_semantics=("parallel",),
        vmem_limit_bytes=vmem_limit,
    )

    if pw == 0:
        # Lane-dense path: last dim is h*w (hp*w for the output), so the big
        # interior store is wide instead of W-lane-masked.
        hw, hwp = h * w, hp * w
        x_flat = x.reshape(b, d, hw)
        kernel = functools.partial(_pad_d_hw_kernel, d=d, hw=hw)
        out_flat = pl.pallas_call(
            kernel,
            out_shape=jax.ShapeDtypeStruct((b, dp, hwp), x.dtype),
            grid_spec=pltpu.PrefetchScalarGridSpec(
                num_scalar_prefetch=0,
                grid=grid,
                in_specs=[pl.BlockSpec((tb, d, hw), lambda i: (i, 0, 0))],
                out_specs=pl.BlockSpec((tb, dp, hwp), lambda i: (i, 0, 0)),
            ),
            compiler_params=cparams,
            cost_estimate=cost,
        )(x_flat)
        return out_flat.reshape(n, c, dp, hp, w)

    # General path: W is padded, keep (D, H, W) explicit (blocks equal the
    # full trailing dims, so the (8,128) rule is satisfied for any D/H/W).
    x_flat = x.reshape(b, d, h, w)
    kernel = functools.partial(_pad_dhw_kernel, d=d, h=h, w=w)
    out_flat = pl.pallas_call(
        kernel,
        out_shape=jax.ShapeDtypeStruct((b, dp, hp, wp), x.dtype),
        grid_spec=pltpu.PrefetchScalarGridSpec(
            num_scalar_prefetch=0,
            grid=grid,
            in_specs=[pl.BlockSpec((tb, d, h, w), lambda i: (i, 0, 0, 0))],
            out_specs=pl.BlockSpec((tb, dp, hp, wp), lambda i: (i, 0, 0, 0)),
        ),
        compiler_params=cparams,
        cost_estimate=cost,
    )(x_flat)
    return out_flat.reshape(n, c, dp, hp, wp)


if __name__ == "__main__":
    key = jax.random.PRNGKey(0)

    # Small NCDHW input consistent with a 3D-conv feature map.
    n, c, d, h, w = 2, 4, 8, 8, 16
    x = jax.random.normal(key, (n, c, d, h, w), dtype=jnp.float32)

    def ref_pad(x, pds):
        return jnp.pad(
            x,
            ((0, 0), (0, 0), (0, pds[0]), (0, pds[1]), (0, pds[2])),
            mode="constant",
            constant_values=0.0,
        )

    # General path (W padded).
    for pds in [(2, 3, 4), (0, 0, 4), (1, 0, 2)]:
        out = jax.block_until_ready(pad_layer(x, pds))
        assert out.shape == (n, c, d + pds[0], h + pds[1], w + pds[2])
        assert jnp.array_equal(out, ref_pad(x, pds)), f"mismatch for {pds}"

    # Lane-dense path (W not padded).
    for pds in [(2, 0, 0), (2, 3, 0), (0, 5, 0)]:
        out = jax.block_until_ready(pad_layer(x, pds))
        assert out.shape == (n, c, d + pds[0], h + pds[1], w + pds[2])
        assert jnp.array_equal(out, ref_pad(x, pds)), f"mismatch for {pds}"

    # Non-f32 dtype (bf16) through the general path.
    x_bf16 = x.astype(jnp.bfloat16)
    out_bf16 = jax.block_until_ready(pad_layer(x_bf16, (1, 2, 3)))
    assert out_bf16.dtype == jnp.bfloat16
    assert jnp.array_equal(out_bf16, ref_pad(x_bf16, (1, 2, 3)))

    # Zero-pad early-return path.
    out0 = jax.block_until_ready(pad_layer(x, (0, 0, 0)))
    assert jnp.array_equal(out0, x)

    print("KERNEL_OK")
</pallas_src>

<mosaic_0001>
module attributes {stable_mosaic.version = 11 : i64} {
  func.func @_pad_dhw_kernel(%arg0: i32, %arg1: memref<4x8x8x16xf32, #tpu.memory_space<vmem>>, %arg2: memref<4x10x11x20xf32, #tpu.memory_space<vmem>>) attributes {dimension_semantics = [#tpu.dimension_semantics<parallel>], iteration_bounds = array<i64: 2>, scalar_prefetch = 0 : i64, scratch_operands = 0 : i64, tpu.core_type = #tpu.core_type<tc>, window_params = [{transform_indices = @transform_0, window_bounds = array<i64: 4, 8, 8, 16>}, {transform_indices = @transform_1, window_bounds = array<i64: 4, 10, 11, 20>}]} {
    %c0 = arith.constant 0 : index
    %c0_0 = arith.constant 0 : index
    %c0_1 = arith.constant 0 : index
    %c0_2 = arith.constant 0 : index
    %0 = vector.load %arg1[%c0, %c0_0, %c0_1, %c0_2] : memref<4x8x8x16xf32, #tpu.memory_space<vmem>>, vector<4x8x8x16xf32>
    %c0_3 = arith.constant 0 : index
    %c0_4 = arith.constant 0 : index
    %c0_5 = arith.constant 0 : index
    %c0_6 = arith.constant 0 : index
    %1 = vector.load %arg2[%c0_3, %c0_4, %c0_5, %c0_6] : memref<4x10x11x20xf32, #tpu.memory_space<vmem>>, vector<4x8x8x16xf32>
    tpu.vector_store %arg2[%c0_3, %c0_4, %c0_5, %c0_6], %0 {strides = array<i32>} : memref<4x10x11x20xf32, #tpu.memory_space<vmem>>, vector<4x8x8x16xf32>,
    %cst = arith.constant 0.000000e+00 : f32
    %2 = vector.broadcast %cst : f32 to vector<4x2x11x20xf32>
    %c0_7 = arith.constant 0 : index
    %c8 = arith.constant 8 : index
    %c0_8 = arith.constant 0 : index
    %c0_9 = arith.constant 0 : index
    %3 = vector.load %arg2[%c0_7, %c8, %c0_8, %c0_9] : memref<4x10x11x20xf32, #tpu.memory_space<vmem>>, vector<4x2x11x20xf32>
    tpu.vector_store %arg2[%c0_7, %c8, %c0_8, %c0_9], %2 {strides = array<i32>} : memref<4x10x11x20xf32, #tpu.memory_space<vmem>>, vector<4x2x11x20xf32>,
    %cst_10 = arith.constant 0.000000e+00 : f32
    %4 = vector.broadcast %cst_10 : f32 to vector<4x8x3x20xf32>
    %c0_11 = arith.constant 0 : index
    %c0_12 = arith.constant 0 : index
    %c8_13 = arith.constant 8 : index
    %c0_14 = arith.constant 0 : index
    %5 = vector.load %arg2[%c0_11, %c0_12, %c8_13, %c0_14] : memref<4x10x11x20xf32, #tpu.memory_space<vmem>>, vector<4x8x3x20xf32>
    tpu.vector_store %arg2[%c0_11, %c0_12, %c8_13, %c0_14], %4 {strides = array<i32>} : memref<4x10x11x20xf32, #tpu.memory_space<vmem>>, vector<4x8x3x20xf32>,
    %cst_15 = arith.constant 0.000000e+00 : f32
    %6 = vector.broadcast %cst_15 : f32 to vector<4x8x8x4xf32>
    %c0_16 = arith.constant 0 : index
    %c0_17 = arith.constant 0 : index
    %c0_18 = arith.constant 0 : index
    %c16 = arith.constant 16 : index
    %7 = vector.load %arg2[%c0_16, %c0_17, %c0_18, %c16] : memref<4x10x11x20xf32, #tpu.memory_space<vmem>>, vector<4x8x8x4xf32>
    tpu.vector_store %arg2[%c0_16, %c0_17, %c0_18, %c16], %6 {strides = array<i32>} : memref<4x10x11x20xf32, #tpu.memory_space<vmem>>, vector<4x8x8x4xf32>,
    return
  }
  func.func @transform_0(%arg0: i32) -> (i32, i32, i32, i32) {
    %c0_i32 = arith.constant 0 : i32
    %c0_i32_0 = arith.constant 0 : i32
    %c0_i32_1 = arith.constant 0 : i32
    %c0_i32_2 = arith.constant 0 : i32
    return %arg0, %c0_i32, %c0_i32_0, %c0_i32_1 : i32, i32, i32, i32
  }
  func.func @transform_1(%arg0: i32) -> (i32, i32, i32, i32) {
    %c0_i32 = arith.constant 0 : i32
    %c0_i32_0 = arith.constant 0 : i32
    %c0_i32_1 = arith.constant 0 : i32
    %c0_i32_2 = arith.constant 0 : i32
    return %arg0, %c0_i32, %c0_i32_0, %c0_i32_1 : i32, i32, i32, i32
  }
}

</mosaic_0001>

<llo_original>
// kernel: tpu_custom_call.1
$region0: #{tpu_custom_call.1}
  #allocation0 [shape = 'u32[]', space=smem, size = 0x4, offset = 0x4, fixed_abs, tag = 'smem constant byte address 0x4 - core index']
  #allocation1 [shape = 'u32[144,128]{1,0:T(1,128)}', space=vmem, size = 0x12000, scoped, tag = 'internal scratch']
  %s0 = inlined_call_operand.hbm [shape: f32[8,8,8,16], index: 0, kind: input, shape index: {}]
  %s1 = inlined_call_operand.vmem [shape: f32[8,10,11,20], index: 1, kind: output, shape index: {}]
  %s2 = sld [smem:[#allocation0]]
  $region41: #{tpu_custom_call.1} parent=0
    _
  %s4 = ssub.s32 1, %s2
  %s5 = scalar_select 0, %s4, %s2
  $region1: #{tpu_custom_call.1} parent=0
    #allocation2 [shape = 'u8[262144]{0}', space=vmem, size = 0x40000, scoped, tag = 'input window, operand 0']
    #allocation3 [shape = 's32[2]{0}', space=sflag, size = 0x8, scoped, tag = 'scoped memory for tpu_custom_call.1']
    %6 = vsyncpa [#allocation3], 0
    %s7 = scalar_lea.sflag [#allocation3], 1
    %8 = vsyncpa %s7, 0
    loop: start=0, step=1, limit=4
    $region2: #{tpu_custom_call.1} parent=1 // loop_pre_header
      _
    $region3: #{tpu_custom_call.1} parent=1 // loop_header
      %s10 = sphi 0, %s14
      %p11 = scmp.ge.s32.totalorder %s10, 4
      %s20 = sphi 0, %s22
      %s23 = sphi 0, %s20
      %s24 = sphi 0, %s23
      %s40 = sphi 0, %s24
      %s46 = sphi 0, %s48
      %s49 = sphi 0, %s46
      %s50 = sphi 0, %s49
      %s66 = sphi 0, %s50
    $region4: #{tpu_custom_call.1} parent=1 // loop_header_branch
      %13 = sbr.rel (%p11) target = $region8
    $region5: #{tpu_custom_call.1} parent=1 // loop_body
      %s15 = ssub.s32 %s10, 1
      %s16 = ssub.s32 %s10, 2
      %s17 = sadd.s32 %s10, 1
      %s18 = ssub.s32 %s10, %s17
      %p19 = scmp.eq.s32.totalorder %s18, 0
      %s21 = sadd.s32 %s20, 1
      %s22 = scalar_select %p19, %s20, %s21
      %p25 = pneg %p19
      %p26 = scmp.eq.s32.totalorder %s10, 1
      %p27 = por %p25, %p26
      %p28 = scmp.ne.s32.totalorder %s20, %s23
      %p29 = scmp.eq.s32.totalorder %s10, 0
      %p30 = por %p28, %p29
      %p31 = scmp.ne.s32.totalorder %s20, %s23
      %p32 = scmp.eq.s32.totalorder %s15, 1
      %p33 = por %p31, %p32
      %p34 = scmp.ne.s32.totalorder %s23, %s24
      %p35 = scmp.eq.s32.totalorder %s15, 0
      %p36 = por %p34, %p35
      %p37 = scmp.ne.s32.totalorder %s23, %s24
      %p38 = scmp.eq.s32.totalorder %s16, 1
      %p39 = por %p37, %p38
      %p41 = scmp.ne.s32.totalorder %s24, %s40
      %p42 = scmp.eq.s32.totalorder %s16, 0
      %p43 = por %p41, %p42
      %s44 = ssub.s32 %s10, %s17
      %p45 = scmp.eq.s32.totalorder %s44, 0
      %s47 = sadd.s32 %s46, 1
      %s48 = scalar_select %p45, %s46, %s47
      %p51 = pneg %p45
      %p52 = scmp.eq.s32.totalorder %s10, 1
      %p53 = por %p51, %p52
      %p54 = scmp.ne.s32.totalorder %s46, %s49
      %p55 = scmp.eq.s32.totalorder %s10, 0
      %p56 = por %p54, %p55
      %p57 = scmp.ne.s32.totalorder %s46, %s49
      %p58 = scmp.eq.s32.totalorder %s15, 1
      %p59 = por %p57, %p58
      %p60 = scmp.ne.s32.totalorder %s49, %s50
      %p61 = scmp.eq.s32.totalorder %s15, 0
      %p62 = por %p60, %p61
      %p63 = scmp.ne.s32.totalorder %s49, %s50
      %p64 = scmp.eq.s32.totalorder %s16, 1
      %p65 = por %p63, %p64
      %p67 = scmp.ne.s32.totalorder %s50, %s66
      %p68 = scmp.eq.s32.totalorder %s16, 0
      %p69 = por %p67, %p68
      %p70 = scmp.le.s32.totalorder 1, %s10
      %p71 = scmp.lt.s32.totalorder %s10, 3
      %p72 = pnand %p70, %p71
      %p73 = pneg %p72
      // Predicated region
      $region9: #{tpu_custom_call.1} parent=5 // pred_check
        _
      $region10: #{tpu_custom_call.1} parent=5 // pred_check_branch
        %75 = sbr.rel (%p72) target = $region12
      $region11: #{tpu_custom_call.1} parent=5 // pred_region
        %s76 = ssub.s32 %s10, 1
      $region12: #{tpu_custom_call.1} parent=5 // pred_fallthru
        _
      %p77 = scmp.lt.s32.totalorder %s10, 2
      // Predicated region
      $region13: #{tpu_custom_call.1} parent=5 // pred_check
        %p78 = pneg %p77
      $region14: #{tpu_custom_call.1} parent=5 // pred_check_branch
        %80 = sbr.rel (%p78) target = $region16
      $region15: #{tpu_custom_call.1} parent=5 // pred_region
        // Predicated region
        $region17: #{tpu_custom_call.1} parent=15 // pred_check
          %p81 = pneg %p30
        $region18: #{tpu_custom_call.1} parent=15 // pred_check_branch
          %83 = sbr.rel (%p81) target = $region20
        $region19: #{tpu_custom_call.1} parent=15 // pred_region
          %s84 = sand.u32 %s20, 1
          %s85 = scalar_lea.sflag [#allocation3], %s84
          %s86 = sand.u32 %s20, 1
          %s87 = smul.addr %s86, 256
          %s88 = scalar_lea.vmem [#allocation2], %s87
          %s89 = smul.u32 4, %s10
          %s91 = ssub.s32 4096, 4096
          %92 = vsyncadd %s85, %s91
          %s93 = smul.addr %s89, 8
          %s94 = smul.addr %s93, 128
          %s95 = scalar_lea.hbm %s0, %s94
          %s96 = sshll.u32 %s88, 4
          %s97 = int_to_ptr.vmem [resolvable:$true] %s96
          %102 = dma.hbm_to_vmem [thread:$0]  %s95, 4096, %s97, %s85, 128, 128, 8
        $region20: #{tpu_custom_call.1} parent=15 // pred_fallthru
          _
      $region16: #{tpu_custom_call.1} parent=5 // pred_fallthru
        _
      %p103 = scmp.le.s32.totalorder 1, %s10
      %p104 = scmp.lt.s32.totalorder %s10, 3
      %p105 = pnand %p103, %p104
      %p106 = pneg %p105
      // Predicated region
      $region21: #{tpu_custom_call.1} parent=5 // pred_check
        _
      $region22: #{tpu_custom_call.1} parent=5 // pred_check_branch
        %108 = sbr.rel (%p105) target = $region24
      $region23: #{tpu_custom_call.1} parent=5 // pred_region
        %s109 = ssub.s32 %s10, 1
        %s110 = sand.u32 %s23, 1
        %s111 = scalar_lea.sflag [#allocation3], %s110
        %s112 = sand.u32 %s23, 1
        %s113 = smul.addr %s112, 256
        %s114 = scalar_lea.vmem [#allocation2], %s113
        // Predicated region
        $region25: #{tpu_custom_call.1} parent=23 // pred_check
          %p115 = pneg %p36
        $region26: #{tpu_custom_call.1} parent=23 // pred_check_branch
          %117 = sbr.rel (%p115) target = $region28
        $region27: #{tpu_custom_call.1} parent=23 // pred_region
          %118 = dma.done %s111, 4096
        $region28: #{tpu_custom_call.1} parent=23 // pred_fallthru
          _
        %s119 = sand.u32 %s23, 1
        %s120 = scalar_lea.sflag [#allocation3], %s119
        %s121 = sand.u32 %s23, 1
        %s122 = smul.addr %s121, 256
        %s123 = scalar_lea.vmem [#allocation2], %s122
        %p124 = pneg %p36
        %p125 = pneg %p33
        %p126 = pneg %p62
        %p127 = pneg %p59
        %s128 = smul.u32 4, %s15
        %p129 = scmp.lt.s32.totalorder %s128, 7
        %s130 = scalar_select %p129, %s128, 7
        %s131 = smul.addr %s130, 20
        %s132 = smul.addr %s131, 8
        %s133 = scalar_lea.vmem %s1, %s132
        %s134 = smul.u32 4, %s15
        %s135 = smul.u32 4, %s15
        %p136 = scmp.lt.s32.totalorder %s135, 7
        %s137 = scalar_select %p136, %s135, 7
        %s138 = smul.addr %s137, 20
        %s139 = smul.addr %s138, 8
        %s140 = scalar_lea.vmem %s1, %s139
        %s141 = smul.u32 4, %s15
        %v142 = vld [vmem:[%s114] sm:$0xff]
        %v143 = vld [vmem:[%s114 + $0x8] sm:$0xff]
        %v144 = vld [vmem:[%s114 + $0x10] sm:$0xff]
        %v145 = vld [vmem:[%s114 + $0x18] sm:$0xff]
        %v146 = vld [vmem:[%s114 + $0x20] sm:$0xff]
        %v147 = vld [vmem:[%s114 + $0x28] sm:$0xff]
        %v148 = vld [vmem:[%s114 + $0x30] sm:$0xff]
        %v149 = vld [vmem:[%s114 + $0x38] sm:$0xff]
        %v150 = vld [vmem:[%s114 + $0x40] sm:$0xff]
        %v151 = vld [vmem:[%s114 + $0x48] sm:$0xff]
        %v152 = vld [vmem:[%s114 + $0x50] sm:$0xff]
        %v153 = vld [vmem:[%s114 + $0x58] sm:$0xff]
        %v154 = vld [vmem:[%s114 + $0x60] sm:$0xff]
        %v155 = vld [vmem:[%s114 + $0x68] sm:$0xff]
        %v156 = vld [vmem:[%s114 + $0x70] sm:$0xff]
        %v157 = vld [vmem:[%s114 + $0x78] sm:$0xff]
        %v158 = vld [vmem:[%s114 + $0x80] sm:$0xff]
        %v159 = vld [vmem:[%s114 + $0x88] sm:$0xff]
        %v160 = vld [vmem:[%s114 + $0x90] sm:$0xff]
        %v161 = vld [vmem:[%s114 + $0x98] sm:$0xff]
        %v162 = vld [vmem:[%s114 + $0xa0] sm:$0xff]
        %v163 = vld [vmem:[%s114 + $0xa8] sm:$0xff]
        %v164 = vld [vmem:[%s114 + $0xb0] sm:$0xff]
        %v165 = vld [vmem:[%s114 + $0xb8] sm:$0xff]
        %v166 = vld [vmem:[%s114 + $0xc0] sm:$0xff]
        %v167 = vld [vmem:[%s114 + $0xc8] sm:$0xff]
        %v168 = vld [vmem:[%s114 + $0xd0] sm:$0xff]
        %v169 = vld [vmem:[%s114 + $0xd8] sm:$0xff]
        %v170 = vld [vmem:[%s114 + $0xe0] sm:$0xff]
        %v171 = vld [vmem:[%s114 + $0xe8] sm:$0xff]
        %v172 = vld [vmem:[%s114 + $0xf0] sm:$0xff]
        %v173 = vld [vmem:[%s114 + $0xf8] sm:$0xff]
        %vm174 = vcmask 130048
        %175 = vst.msk [vmem:[%s140] sm:$0xff] %vm174, %v142
        %176 = vst.msk [vmem:[%s140 + $0x10] sm:$0xff] %vm174, %v143
        %177 = vst.msk [vmem:[%s140 + $0x20] sm:$0xff] %vm174, %v144
        %178 = vst.msk [vmem:[%s140 + $0x30] sm:$0xff] %vm174, %v145
        %179 = vst.msk [vmem:[%s140 + $0x40] sm:$0xff] %vm174, %v146
        %180 = vst.msk [vmem:[%s140 + $0x50] sm:$0xff] %vm174, %v147
        %181 = vst.msk [vmem:[%s140 + $0x60] sm:$0xff] %vm174, %v148
        %182 = vst.msk [vmem:[%s140 + $0x70] sm:$0xff] %vm174, %v149
        %183 = vst.msk [vmem:[%s140 + $0xa0] sm:$0xff] %vm174, %v150
        %184 = vst.msk [vmem:[%s140 + $0xb0] sm:$0xff] %vm174, %v151
        %185 = vst.msk [vmem:[%s140 + $0xc0] sm:$0xff] %vm174, %v152
        %186 = vst.msk [vmem:[%s140 + $0xd0] sm:$0xff] %vm174, %v153
        %187 = vst.msk [vmem:[%s140 + $0xe0] sm:$0xff] %vm174, %v154
        %188 = vst.msk [vmem:[%s140 + $0xf0] sm:$0xff] %vm174, %v155
        %189 = vst.msk [vmem:[%s140 + $0x100] sm:$0xff] %vm174, %v156
        %190 = vst.msk [vmem:[%s140 + $0x110] sm:$0xff] %vm174, %v157
        %191 = vst.msk [vmem:[%s140 + $0x140] sm:$0xff] %vm174, %v158
        %192 = vst.msk [vmem:[%s140 + $0x150] sm:$0xff] %vm174, %v159
        %193 = vst.msk [vmem:[%s140 + $0x160] sm:$0xff] %vm174, %v160
        %194 = vst.msk [vmem:[%s140 + $0x170] sm:$0xff] %vm174, %v161
        %195 = vst.msk [vmem:[%s140 + $0x180] sm:$0xff] %vm174, %v162
        %196 = vst.msk [vmem:[%s140 + $0x190] sm:$0xff] %vm174, %v163
        %197 = vst.msk [vmem:[%s140 + $0x1a0] sm:$0xff] %vm174, %v164
        %198 = vst.msk [vmem:[%s140 + $0x1b0] sm:$0xff] %vm174, %v165
        %199 = vst.msk [vmem:[%s140 + $0x1e0] sm:$0xff] %vm174, %v166
        %200 = vst.msk [vmem:[%s140 + $0x1f0] sm:$0xff] %vm174, %v167
        %201 = vst.msk [vmem:[%s140 + $0x200] sm:$0xff] %vm174, %v168
        %202 = vst.msk [vmem:[%s140 + $0x210] sm:$0xff] %vm174, %v169
        %203 = vst.msk [vmem:[%s140 + $0x220] sm:$0xff] %vm174, %v170
        %204 = vst.msk [vmem:[%s140 + $0x230] sm:$0xff] %vm174, %v171
        %205 = vst.msk [vmem:[%s140 + $0x240] sm:$0xff] %vm174, %v172
        %206 = vst.msk [vmem:[%s140 + $0x250] sm:$0xff] %vm174, %v173
        %s207 = scalar_lea.vmem %s140, 128
        %vm208 = vcmask 162816
        %209 = vst.msk [vmem:[%s207] sm:$0xff] %vm208, 0.0
        %vm210 = vcmask 157696
        %211 = vst.msk [vmem:[%s207 + $0x8] sm:$0x7] %vm210, 0.0
        %212 = vst.msk [vmem:[%s207 + $0x10] sm:$0xff] %vm208, 0.0
        %213 = vst.msk [vmem:[%s207 + $0x18] sm:$0x7] %vm210, 0.0
        %214 = vst.msk [vmem:[%s207 + $0xa0] sm:$0xff] %vm208, 0.0
        %215 = vst.msk [vmem:[%s207 + $0xa8] sm:$0x7] %vm210, 0.0
        %216 = vst.msk [vmem:[%s207 + $0xb0] sm:$0xff] %vm208, 0.0
        %217 = vst.msk [vmem:[%s207 + $0xb8] sm:$0x7] %vm210, 0.0
        %218 = vst.msk [vmem:[%s207 + $0x140] sm:$0xff] %vm208, 0.0
        %219 = vst.msk [vmem:[%s207 + $0x148] sm:$0x7] %vm210, 0.0
        %220 = vst.msk [vmem:[%s207 + $0x150] sm:$0xff] %vm208, 0.0
        %221 = vst.msk [vmem:[%s207 + $0x158] sm:$0x7] %vm210, 0.0
        %222 = vst.msk [vmem:[%s207 + $0x1e0] sm:$0xff] %vm208, 0.0
        %223 = vst.msk [vmem:[%s207 + $0x1e8] sm:$0x7] %vm210, 0.0
        %224 = vst.msk [vmem:[%s207 + $0x1f0] sm:$0xff] %vm208, 0.0
        %225 = vst.msk [vmem:[%s207 + $0x1f8] sm:$0x7] %vm210, 0.0
        %226 = vst.msk [vmem:[%s140 + $0x8] sm:$0x7] %vm210, 0.0
        %227 = vst.msk [vmem:[%s140 + $0x18] sm:$0x7] %vm210, 0.0
        %228 = vst.msk [vmem:[%s140 + $0x28] sm:$0x7] %vm210, 0.0
        %229 = vst.msk [vmem:[%s140 + $0x38] sm:$0x7] %vm210, 0.0
        %230 = vst.msk [vmem:[%s140 + $0x48] sm:$0x7] %vm210, 0.0
        %231 = vst.msk [vmem:[%s140 + $0x58] sm:$0x7] %vm210, 0.0
        %232 = vst.msk [vmem:[%s140 + $0x68] sm:$0x7] %vm210, 0.0
        %233 = vst.msk [vmem:[%s140 + $0x78] sm:$0x7] %vm210, 0.0
        %234 = vst.msk [vmem:[%s140 + $0xa8] sm:$0x7] %vm210, 0.0
        %235 = vst.msk [vmem:[%s140 + $0xb8] sm:$0x7] %vm210, 0.0
        %236 = vst.msk [vmem:[%s140 + $0xc8] sm:$0x7] %vm210, 0.0
        %237 = vst.msk [vmem:[%s140 + $0xd8] sm:$0x7] %vm210, 0.0
        %238 = vst.msk [vmem:[%s140 + $0xe8] sm:$0x7] %vm210, 0.0
        %239 = vst.msk [vmem:[%s140 + $0xf8] sm:$0x7] %vm210, 0.0
        %240 = vst.msk [vmem:[%s140 + $0x108] sm:$0x7] %vm210, 0.0
        %241 = vst.msk [vmem:[%s140 + $0x118] sm:$0x7] %vm210, 0.0
        %242 = vst.msk [vmem:[%s140 + $0x148] sm:$0x7] %vm210, 0.0
        %243 = vst.msk [vmem:[%s140 + $0x158] sm:$0x7] %vm210, 0.0
        %244 = vst.msk [vmem:[%s140 + $0x168] sm:$0x7] %vm210, 0.0
        %245 = vst.msk [vmem:[%s140 + $0x178] sm:$0x7] %vm210, 0.0
        %246 = vst.msk [vmem:[%s140 + $0x188] sm:$0x7] %vm210, 0.0
        %247 = vst.msk [vmem:[%s140 + $0x198] sm:$0x7] %vm210, 0.0
        %248 = vst.msk [vmem:[%s140 + $0x1a8] sm:$0x7] %vm210, 0.0
        %249 = vst.msk [vmem:[%s140 + $0x1b8] sm:$0x7] %vm210, 0.0
        %250 = vst.msk [vmem:[%s140 + $0x1e8] sm:$0x7] %vm210, 0.0
        %251 = vst.msk [vmem:[%s140 + $0x1f8] sm:$0x7] %vm210, 0.0
        %252 = vst.msk [vmem:[%s140 + $0x208] sm:$0x7] %vm210, 0.0
        %253 = vst.msk [vmem:[%s140 + $0x218] sm:$0x7] %vm210, 0.0
        %254 = vst.msk [vmem:[%s140 + $0x228] sm:$0x7] %vm210, 0.0
        %255 = vst.msk [vmem:[%s140 + $0x238] sm:$0x7] %vm210, 0.0
        %256 = vst.msk [vmem:[%s140 + $0x248] sm:$0x7] %vm210, 0.0
        %257 = vst.msk [vmem:[%s140 + $0x258] sm:$0x7] %vm210, 0.0
        %vm258 = vcmask 162944
        %259 = vst.msk [vmem:[%s140] sm:$0xff] %vm258, 0.0
        %260 = vst.msk [vmem:[%s140 + $0x10] sm:$0xff] %vm258, 0.0
        %261 = vst.msk [vmem:[%s140 + $0x20] sm:$0xff] %vm258, 0.0
        %262 = vst.msk [vmem:[%s140 + $0x30] sm:$0xff] %vm258, 0.0
        %263 = vst.msk [vmem:[%s140 + $0x40] sm:$0xff] %vm258, 0.0
        %264 = vst.msk [vmem:[%s140 + $0x50] sm:$0xff] %vm258, 0.0
        %265 = vst.msk [vmem:[%s140 + $0x60] sm:$0xff] %vm258, 0.0
        %266 = vst.msk [vmem:[%s140 + $0x70] sm:$0xff] %vm258, 0.0
        %267 = vst.msk [vmem:[%s140 + $0xa0] sm:$0xff] %vm258, 0.0
        %268 = vst.msk [vmem:[%s140 + $0xb0] sm:$0xff] %vm258, 0.0
        %269 = vst.msk [vmem:[%s140 + $0xc0] sm:$0xff] %vm258, 0.0
        %270 = vst.msk [vmem:[%s140 + $0xd0] sm:$0xff] %vm258, 0.0
        %271 = vst.msk [vmem:[%s140 + $0xe0] sm:$0xff] %vm258, 0.0
        %272 = vst.msk [vmem:[%s140 + $0xf0] sm:$0xff] %vm258, 0.0
        %273 = vst.msk [vmem:[%s140 + $0x100] sm:$0xff] %vm258, 0.0
        %274 = vst.msk [vmem:[%s140 + $0x110] sm:$0xff] %vm258, 0.0
        %275 = vst.msk [vmem:[%s140 + $0x140] sm:$0xff] %vm258, 0.0
        %276 = vst.msk [vmem:[%s140 + $0x150] sm:$0xff] %vm258, 0.0
        %277 = vst.msk [vmem:[%s140 + $0x160] sm:$0xff] %vm258, 0.0
        %278 = vst.msk [vmem:[%s140 + $0x170] sm:$0xff] %vm258, 0.0
        %279 = vst.msk [vmem:[%s140 + $0x180] sm:$0xff] %vm258, 0.0
        %280 = vst.msk [vmem:[%s140 + $0x190] sm:$0xff] %vm258, 0.0
        %281 = vst.msk [vmem:[%s140 + $0x1a0] sm:$0xff] %vm258, 0.0
        %282 = vst.msk [vmem:[%s140 + $0x1b0] sm:$0xff] %vm258, 0.0
        %283 = vst.msk [vmem:[%s140 + $0x1e0] sm:$0xff] %vm258, 0.0
        %284 = vst.msk [vmem:[%s140 + $0x1f0] sm:$0xff] %vm258, 0.0
        %285 = vst.msk [vmem:[%s140 + $0x200] sm:$0xff] %vm258, 0.0
        %286 = vst.msk [vmem:[%s140 + $0x210] sm:$0xff] %vm258, 0.0
        %287 = vst.msk [vmem:[%s140 + $0x220] sm:$0xff] %vm258, 0.0
        %288 = vst.msk [vmem:[%s140 + $0x230] sm:$0xff] %vm258, 0.0
        %289 = vst.msk [vmem:[%s140 + $0x240] sm:$0xff] %vm258, 0.0
        %290 = vst.msk [vmem:[%s140 + $0x250] sm:$0xff] %vm258, 0.0
        %s291 = smul.u32 4, %s15
        %p292 = scmp.lt.s32.totalorder %s291, 7
        %s293 = scalar_select %p292, %s291, 7
        %s294 = smul.addr %s293, 20
        %s295 = smul.addr %s294, 8
        %s296 = scalar_lea.vmem %s1, %s295
        // Predicated region
        $region29: #{tpu_custom_call.1} parent=23 // pred_check
          %p297 = pneg %p59
        $region30: #{tpu_custom_call.1} parent=23 // pred_check_branch
          %299 = sbr.rel (%p297) target = $region32
        $region31: #{tpu_custom_call.1} parent=23 // pred_region
          %s300 = smul.u32 4, %s15
        $region32: #{tpu_custom_call.1} parent=23 // pred_fallthru
          _
      $region24: #{tpu_custom_call.1} parent=5 // pred_fallthru
        _
      %p301 = scmp.le.s32.totalorder 2, %s10
      // Predicated region
      $region33: #{tpu_custom_call.1} parent=5 // pred_check
        %p302 = pneg %p301
      $region34: #{tpu_custom_call.1} parent=5 // pred_check_branch
        %304 = sbr.rel (%p302) target = $region36
      $region35: #{tpu_custom_call.1} parent=5 // pred_region
        %s305 = ssub.s32 %s10, 2
        // Predicated region
        $region37: #{tpu_custom_call.1} parent=35 // pred_check
          %p306 = pneg %p65
        $region38: #{tpu_custom_call.1} parent=35 // pred_check_branch
          %308 = sbr.rel (%p306) target = $region40
        $region39: #{tpu_custom_call.1} parent=35 // pred_region
          %s309 = smul.u32 4, %s16
          %p310 = scmp.lt.s32.totalorder %s309, 7
          %s311 = scalar_select %p310, %s309, 7
          %s312 = smul.addr %s311, 20
          %s313 = smul.addr %s312, 8
          %s314 = scalar_lea.vmem %s1, %s313
        $region40: #{tpu_custom_call.1} parent=35 // pred_fallthru
          _
      $region36: #{tpu_custom_call.1} parent=5 // pred_fallthru
        _
    $region6: #{tpu_custom_call.1} parent=1 // loop_footer
      %s14 = sadd.s32 1, %s10
    $region7: #{tpu_custom_call.1} parent=1 // loop_footer_branch
      %9 = sbr.rel target = $region3
    $region8: #{tpu_custom_call.1} parent=1 // loop_exit
      _
    %315 = vsyncpa [#allocation3], 1
    %s316 = scalar_lea.sflag [#allocation3], 1
    %317 = vsyncpa %s316, 1

</llo_original>
